<compile_context>
chip_gen: v7x
topology: tpu7x:2x2x1
jax: 0.10.0
libtpu: 0.0.40
codegen_flags: <defaults>
</compile_context>

<pallas_src>
import jax
import jax.numpy as jnp
from jax.experimental import pallas as pl
from jax.experimental.pallas import tpu as pltpu


# ---------------- Pallas kernels ----------------

def _absmax_kernel(x_ref, out_ref, acc_ref):
    """Running elementwise max(|x|) over the inner (arbitrary) grid axis.

    acc_ref is a block-sized f32 VMEM accumulator; the expensive cross-lane/sublane
    reduce happens only once, in the last-program epilogue, and the (broadcast)
    partial max is written to this partition's output block.
    """
    i = pl.program_id(1)

    @pl.when(i == 0)
    def _():
        acc_ref[...] = jnp.zeros_like(acc_ref)

    # Pure VPU op per block; hidden under the streaming DMA.
    acc_ref[...] = jnp.maximum(acc_ref[...], jnp.abs(x_ref[...].astype(jnp.float32)))

    @pl.when(i == pl.num_programs(1) - 1)
    def _():
        m = jnp.max(acc_ref[...], axis=(0, 1), keepdims=True)   # single XLU reduce
        out_ref[...] = jnp.broadcast_to(m, out_ref.shape)


def _quant_kernel(s_ref, x_ref, o_ref):
    """Elementwise round(x * inv_s) * s; [s, inv_s] are scalars held in SMEM."""
    s = s_ref[0]
    inv_s = s_ref[1]
    x = x_ref[...].astype(jnp.float32)
    o_ref[...] = (jnp.round(x * inv_s) * s).astype(o_ref.dtype)


# ---------------- Wrapper ----------------

def uniform_quantize(x: jax.Array, bit_width: int) -> jax.Array:
    orig_shape = x.shape
    orig_dtype = x.dtype

    C = 128                      # lane dimension
    n = x.size
    R = pl.cdiv(n, C)            # rows of the (R, 128) slab

    # Tile rows: big enough to amortize per-grid-step overhead, small enough that the
    # in+out double-buffered tiles stay ~2 MiB of VMEM (safe on v5e/v6e/v7x defaults).
    MAX_BLOCK_ROWS = 1024        # (1024, 128) f32 tile = 512 KiB
    block_rows = min(MAX_BLOCK_ROWS, ((R + 7) // 8) * 8)
    nblk = pl.cdiv(R, block_rows)

    # Split the abs-max reduction into 2 independent partitions when possible so the
    # leading "parallel" axis can shard across v7x's two TensorCores (no-op on v5e/v6e).
    P = 2 if (nblk >= 2 and nblk % 2 == 0) else 1
    nblk_inner = nblk // P

    Rp = nblk * block_rows
    pad = Rp * C - n

    xf = jnp.reshape(x, (-1,))                 # row-major flatten (free for contiguous x)
    if pad:
        xf = jnp.pad(xf, (0, pad))             # zeros: neutral for abs-max, quantize to 0
    xf = xf.reshape(Rp, C)                     # native dtype -- no f32 upcast in HBM

    # ---- Pass 1: global abs-max (per-partition partials, combined below) ----
    partials = pl.pallas_call(
        _absmax_kernel,
        out_shape=jax.ShapeDtypeStruct((P * 8, C), jnp.float32),
        grid=(P, nblk_inner),
        in_specs=[pl.BlockSpec((block_rows, C),
                               lambda p, i: (p * nblk_inner + i, 0))],
        out_specs=pl.BlockSpec((8, C), lambda p, i: (p, 0)),
        scratch_shapes=[pltpu.VMEM((block_rows, C), jnp.float32)],
        compiler_params=pltpu.CompilerParams(
            dimension_semantics=("parallel", "arbitrary")),
    )(xf)
    amax = jnp.max(partials)                   # tiny (P*8, 128) combine in XLA

    # Scalar glue: s = max|x| / (2**(b-1) - 1); inv_s precomputed so the hot loop
    # multiplies instead of divides.  amax == 0 gives inv_s = inf and NaN outputs,
    # intentionally matching the PyTorch module's behavior for an all-zero input.
    denom = jnp.float32((1 << (bit_width - 1)) - 1)
    s = amax / denom
    inv_s = jnp.float32(1.0) / s
    s_arr = jnp.stack([s, inv_s]).astype(jnp.float32)      # (2,) scalars for SMEM

    # ---- Pass 2: elementwise quantize/dequantize (fully parallel) ----
    qf = pl.pallas_call(
        _quant_kernel,
        out_shape=jax.ShapeDtypeStruct((Rp, C), orig_dtype),   # native-dtype output
        grid=(nblk,),
        in_specs=[
            pl.BlockSpec(memory_space=pltpu.SMEM),              # [s, inv_s]
            pl.BlockSpec((block_rows, C), lambda i: (i, 0)),    # x tile
        ],
        out_specs=pl.BlockSpec((block_rows, C), lambda i: (i, 0)),
        compiler_params=pltpu.CompilerParams(
            dimension_semantics=("parallel",)),
    )(s_arr, xf)

    if pad:
        out = qf.reshape(-1)[:n].reshape(orig_shape)
    else:
        out = qf.reshape(orig_shape)           # free reshape; no slice / astype pass
    return out


# ---------------- Demo / self-check ----------------

if __name__ == "__main__":
    key = jax.random.PRNGKey(0)
    # Small NCHW-like input consistent with conv-activation quantization.
    x = jax.random.normal(key, (2, 4, 16, 16), dtype=jnp.float32)
    bit_width = 8

    out = jax.block_until_ready(uniform_quantize(x, bit_width))

    # Pure-JAX reference (literal PyTorch formula).
    max_val = jnp.max(jnp.abs(x))
    denom = jnp.float32(2 ** (bit_width - 1) - 1)
    s = max_val / denom
    ref_div = jnp.round(x / s) * s
    # The kernel multiplies by a precomputed reciprocal; on exact rounding-tie boundaries
    # this can differ from true division by (at most) one quantization step.
    ref_mul = jnp.round(x * (jnp.float32(1.0) / s)) * s

    assert out.shape == x.shape and out.dtype == x.dtype
    elem_ok = jnp.isclose(out, ref_div, atol=1e-6) | (out == ref_mul)
    assert bool(jnp.all(elem_ok))
    assert float(jnp.max(jnp.abs(out - ref_div))) <= float(s) * 1.001
    print("KERNEL_OK")
</pallas_src>

<mosaic_0001>
module attributes {stable_mosaic.version = 11 : i64} {
  func.func @_absmax_kernel(%arg0: i32, %arg1: i32, %arg2: memref<16x128xf32, #tpu.memory_space<vmem>>, %arg3: memref<8x128xf32, #tpu.memory_space<vmem>>, %arg4: memref<16x128xf32, #tpu.memory_space<vmem>>) attributes {dimension_semantics = [#tpu.dimension_semantics<parallel>, #tpu.dimension_semantics<arbitrary>], iteration_bounds = array<i64: 1, 1>, scalar_prefetch = 0 : i64, scratch_operands = 1 : i64, tpu.core_type = #tpu.core_type<tc>, window_params = [{transform_indices = @transform_0, window_bounds = array<i64: 16, 128>}, {transform_indices = @transform_1, window_bounds = array<i64: 8, 128>}]} {
    %c0_i32 = arith.constant 0 : i32
    %0 = arith.cmpi eq, %arg1, %c0_i32 : i32
    %1 = arith.extui %0 : i1 to i32
    %c0_i32_0 = arith.constant 0 : i32
    %2 = arith.cmpi ne, %1, %c0_i32_0 : i32
    scf.if %2 {
      %cst = arith.constant 0.000000e+00 : f32
      %11 = vector.broadcast %cst : f32 to vector<16x128xf32>
      %c0_8 = arith.constant 0 : index
      %c0_9 = arith.constant 0 : index
      %12 = vector.load %arg4[%c0_8, %c0_9] : memref<16x128xf32, #tpu.memory_space<vmem>>, vector<16x128xf32>
      tpu.vector_store %arg4[%c0_8, %c0_9], %11 {strides = array<i32>} : memref<16x128xf32, #tpu.memory_space<vmem>>, vector<16x128xf32>,
    } else {
    }
    %c0 = arith.constant 0 : index
    %c0_1 = arith.constant 0 : index
    %3 = vector.load %arg4[%c0, %c0_1] : memref<16x128xf32, #tpu.memory_space<vmem>>, vector<16x128xf32>
    %c0_2 = arith.constant 0 : index
    %c0_3 = arith.constant 0 : index
    %4 = vector.load %arg2[%c0_2, %c0_3] : memref<16x128xf32, #tpu.memory_space<vmem>>, vector<16x128xf32>
    %5 = math.absf %4 : vector<16x128xf32>
    %6 = arith.maximumf %3, %5 : vector<16x128xf32>
    %c0_4 = arith.constant 0 : index
    %c0_5 = arith.constant 0 : index
    %7 = vector.load %arg4[%c0_4, %c0_5] : memref<16x128xf32, #tpu.memory_space<vmem>>, vector<16x128xf32>
    tpu.vector_store %arg4[%c0_4, %c0_5], %6 {strides = array<i32>} : memref<16x128xf32, #tpu.memory_space<vmem>>, vector<16x128xf32>,
    %c0_i32_6 = arith.constant 0 : i32
    %8 = arith.cmpi eq, %arg1, %c0_i32_6 : i32
    %9 = arith.extui %8 : i1 to i32
    %c0_i32_7 = arith.constant 0 : i32
    %10 = arith.cmpi ne, %9, %c0_i32_7 : i32
    scf.if %10 {
      %c0_8 = arith.constant 0 : index
      %c0_9 = arith.constant 0 : index
      %11 = vector.load %arg4[%c0_8, %c0_9] : memref<16x128xf32, #tpu.memory_space<vmem>>, vector<16x128xf32>
      %12 = vector.shape_cast %11 : vector<16x128xf32> to vector<1x16x128xf32>
      %cst = arith.constant dense<0xFF800000> : vector<1xf32>
      %13 = vector.multi_reduction <maximumf>, %12, %cst [1, 2] : vector<1x16x128xf32> to vector<1xf32>
      %14 = vector.shape_cast %13 : vector<1xf32> to vector<1x1x1xf32>
      %15 = vector.extract %14[0, 0, 0] : f32 from vector<1x1x1xf32>
      %16 = vector.broadcast %15 : f32 to vector<1x1xf32>
      %17 = vector.shape_cast %16 : vector<1x1xf32> to vector<1x1xf32>
      %18 = vector.broadcast %17 : vector<1x1xf32> to vector<8x128xf32>
      %c0_10 = arith.constant 0 : index
      %c0_11 = arith.constant 0 : index
      %19 = vector.load %arg3[%c0_10, %c0_11] : memref<8x128xf32, #tpu.memory_space<vmem>>, vector<8x128xf32>
      tpu.vector_store %arg3[%c0_10, %c0_11], %18 {strides = array<i32>} : memref<8x128xf32, #tpu.memory_space<vmem>>, vector<8x128xf32>,
    } else {
    }
    return
  }
  func.func @transform_0(%arg0: i32, %arg1: i32) -> (i32, i32) {
    %c1_i32 = arith.constant 1 : i32
    %0 = arith.muli %arg0, %c1_i32 : i32
    %1 = arith.addi %0, %arg1 : i32
    %c0_i32 = arith.constant 0 : i32
    %c0_i32_0 = arith.constant 0 : i32
    return %1, %c0_i32 : i32, i32
  }
  func.func @transform_1(%arg0: i32, %arg1: i32) -> (i32, i32) {
    %c0_i32 = arith.constant 0 : i32
    %c0_i32_0 = arith.constant 0 : i32
    return %arg0, %c0_i32 : i32, i32
  }
}

</mosaic_0001>

<llo_original>
// kernel: tpu_custom_call.1
$region0: #{tpu_custom_call.1}
  #allocation0 [shape = 'u32[]', space=smem, size = 0x4, offset = 0x4, fixed_abs, tag = 'smem constant byte address 0x4 - core index']
  #allocation1 [shape = 'u32[144,128]{1,0:T(1,128)}', space=vmem, size = 0x12000, scoped, tag = 'internal scratch']
  #allocation2 [shape = 'f32[16,128]{1,0:T(8,128)}', space=vmem, size = 0x2000, scoped, tag = 'scratch operand']
  %s0 = inlined_call_operand.hbm [shape: f32[16,128], index: 0, kind: input, shape index: {}]
  %s1 = inlined_call_operand.hbm [shape: f32[8,128], index: 1, kind: output, shape index: {}]
  %s2 = sld [smem:[#allocation0]]
  $region26: #{tpu_custom_call.1} parent=0
    _
  %s4 = ssub.s32 1, %s2
  %s5 = scalar_select 0, %s4, %s2
  $region1: #{tpu_custom_call.1} parent=0
    #allocation3 [shape = 'u8[8192]{0}', space=vmem, size = 0x2000, scoped, tag = 'input window, operand 0, single buffered']
    #allocation4 [shape = 's32[1]{0}', space=sflag, size = 0x4, scoped, tag = 'scoped memory for tpu_custom_call.1']
    #allocation5 [shape = 's32[1]{0}', space=sflag, size = 0x4, scoped, tag = 'scoped memory for tpu_custom_call.1']
    #allocation6 [shape = 'u8[4096]{0}', space=vmem, size = 0x1000, scoped, tag = 'output window, operand 0, single buffered']
    %6 = vsyncpa [#allocation4], 0
    %7 = vsyncpa [#allocation5], 0
    // Predicated region
    $region2: #{tpu_custom_call.1} parent=1 // pred_check
      _
    $region3: #{tpu_custom_call.1} parent=1 // pred_check_branch
      %9 = sbr.rel (0) target = $region5
    $region4: #{tpu_custom_call.1} parent=1 // pred_region
      %s10 = sadd.s32 0, 0
      %s11 = smul.u32 2, %s10
      %s13 = ssub.s32 256, 256
      %14 = vsyncadd [#allocation4], %s13
      %s15 = smul.addr %s11, 128
      %s16 = scalar_lea.hbm %s0, %s15
      %s17 = sshll.u32 [#allocation3], 4
      %s18 = int_to_ptr.vmem [resolvable:$true] %s17
      %23 = dma.hbm_to_vmem [thread:$0]  %s16, 256, %s18, [#allocation4], 128, 128, 8
    $region5: #{tpu_custom_call.1} parent=1 // pred_fallthru
      _
    // Predicated region
    $region6: #{tpu_custom_call.1} parent=1 // pred_check
      _
    $region7: #{tpu_custom_call.1} parent=1 // pred_check_branch
      %25 = sbr.rel (0) target = $region9
    $region8: #{tpu_custom_call.1} parent=1 // pred_region
      %26 = dma.done [#allocation4], 256
    $region9: #{tpu_custom_call.1} parent=1 // pred_fallthru
      _
    %s27 = sadd.s32 0, 0
    %s28 = smul.u32 2, %s27
    %p29 = scmp.eq.s32.totalorder 0, 0
    // Predicated region
    $region10: #{tpu_custom_call.1} parent=1 // pred_check
      %p30 = pneg %p29
    $region11: #{tpu_custom_call.1} parent=1 // pred_check_branch
      %32 = sbr.rel (%p30) target = $region13
    $region12: #{tpu_custom_call.1} parent=1 // pred_region
      %33 = vst [vmem:[#allocation2] sm:$0xff] 0.0
      %34 = vst [vmem:[#allocation2 + $0x8] sm:$0xff] 0.0
    $region13: #{tpu_custom_call.1} parent=1 // pred_fallthru
      _
    %v35 = vld [vmem:[#allocation2] sm:$0xff]
    %v36 = vld [vmem:[#allocation2 + $0x8] sm:$0xff]
    %v37 = vld [vmem:[#allocation3] sm:$0xff]
    %v38 = vld [vmem:[#allocation3 + $0x8] sm:$0xff]
    %v39 = vand.u32 2147483647, %v37
    %v40 = vand.u32 2147483647, %v38
    %v41 = vmax.f32 %v35, %v39
    %v42 = vmax.f32 %v36, %v40
    %43 = vst [vmem:[#allocation2] sm:$0xff] %v41
    %44 = vst [vmem:[#allocation2 + $0x8] sm:$0xff] %v42
    // Predicated region
    $region14: #{tpu_custom_call.1} parent=1 // pred_check
      %p45 = pneg %p29
    $region15: #{tpu_custom_call.1} parent=1 // pred_check_branch
      %47 = sbr.rel (%p45) target = $region17
    $region16: #{tpu_custom_call.1} parent=1 // pred_region
      %v48 = vld [vmem:[#allocation2] sm:$0xff]
      %v49 = vld [vmem:[#allocation2 + $0x8] sm:$0xff]
      %v50 = vmax.f32 %v48, %v49
      %51 = vmax.xlane.f32.xlu0 %v50
      %v52 = vpop.xlane.xlu0 %51
      %v53 = vrot.slane %v52, 4
      %v54 = vmax.f32 %v52, %v53
      %v55 = vrot.slane %v54, 2
      %v56 = vmax.f32 %v54, %v55
      %v57 = vrot.slane %v56, 1
      %v58 = vmax.f32 %v56, %v57
      %s59 = vtos %v58
      %v60 = vstv %s59
      %61 = vst [vmem:[#allocation6] sm:$0xff] %v60
    $region17: #{tpu_custom_call.1} parent=1 // pred_fallthru
      _
    // Predicated region
    $region18: #{tpu_custom_call.1} parent=1 // pred_check
      _
    $region19: #{tpu_custom_call.1} parent=1 // pred_check_branch
      %63 = sbr.rel (0) target = $region21
    $region20: #{tpu_custom_call.1} parent=1 // pred_region
      %s65 = ssub.s32 128, 128
      %66 = vsyncadd [#allocation5], %s65
      %s68 = sshll.u32 [#allocation6], 4
      %s69 = int_to_ptr.vmem [resolvable:$true] %s68
      %71 = dma.vmem_to_hbm [thread:$0]  %s69, 128, %s1, [#allocation5]
    $region21: #{tpu_custom_call.1} parent=1 // pred_fallthru
      _
    // Predicated region
    $region22: #{tpu_custom_call.1} parent=1 // pred_check
      _
    $region23: #{tpu_custom_call.1} parent=1 // pred_check_branch
      %73 = sbr.rel (0) target = $region25
    $region24: #{tpu_custom_call.1} parent=1 // pred_region
      %74 = dma.done [#allocation5], 128
    $region25: #{tpu_custom_call.1} parent=1 // pred_fallthru
      _
    %75 = vsyncpa [#allocation4], 1
    %76 = vsyncpa [#allocation5], 1

</llo_original>
